<compile_context>
chip_gen: v6e
topology: v6e:2x2x1
jax: 0.10.0
libtpu: 0.0.40
codegen_flags: <defaults>
</compile_context>

<pallas_src>
import functools

import numpy as np
import jax
import jax.numpy as jnp
from jax.experimental import pallas as pl
from jax.experimental.pallas import tpu as pltpu

EPS = 1e-5  # PyTorch BatchNorm default eps


# ----------------------------------------------------------------------------
# Fused kernel: conv(block-diag, bias-in-matmul) + maxpool + ReLU + h1(BN2-folded)
#               + ReLU + output layer (VPU reduction) -- single shot, no grid.
# ----------------------------------------------------------------------------
def fused_kernel(xe_ref, xo_ref, wc_ref, w1_ref, b1_ref, w2_ref, b2_ref, out_ref):
    # xe_ref/xo_ref: (Bp, Kc1) even/odd im2col rows, last lane == 1.0 (conv-bias lane)
    # wc_ref:        (Kc1, NP) block-diagonal BN1-folded conv weight + bias row, lane-padded
    # w1_ref:        (NP, H)   BN2-folded, flatten-permuted h1 weight (zero rows in padding)
    # b1_ref:        (1, H)    BN2-folded h1 bias
    # w2_ref:        (1, H)    output-layer weight row
    # b2_ref:        (1,)      output-layer bias (SMEM scalar)
    # out_ref:       (Bp, 1)
    ce = jnp.dot(xe_ref[...], wc_ref[...], preferred_element_type=jnp.float32)
    co = jnp.dot(xo_ref[...], wc_ref[...], preferred_element_type=jnp.float32)
    # MaxPool1d(kernel=2) == elementwise max of even/odd conv positions; identical folded
    # bias on both halves commutes with the max, so bias-in-matmul stays exact.  Then ReLU.
    a = jnp.maximum(jnp.maximum(ce, co), 0.0)                     # (Bp, NP), flattened layout
    h = jnp.dot(a, w1_ref[...], preferred_element_type=jnp.float32) + b1_ref[...]
    h = jnp.maximum(h, 0.0)                                       # (Bp, H)
    # (H,1) matmul would use one MXU lane; broadcast-mul + lane reduce on the VPU/XLU instead.
    out_ref[...] = jnp.sum(h * w2_ref[...], axis=-1, keepdims=True) + b2_ref[0]


# ----------------------------------------------------------------------------
# Trace-time parameter folding (done ONCE, outside the jitted forward)
# ----------------------------------------------------------------------------
def _round_up(x, m):
    return (x + m - 1) // m * m


def fold_params(params, *, input_size, K, stride, padding, pool):
    f32 = jnp.float32
    C = params["conv_w"].shape[0]
    H = params["h1_w"].shape[0]
    Lout = (input_size - K + 2 * padding) // stride + 1
    Lpool = Lout // pool
    F = Lpool * C
    NP = _round_up(F, 128)                      # lane-dense internal width

    # BN1 fold into conv weight/bias
    s1 = params["bn1_g"] * jax.lax.rsqrt(params["bn1_v"] + EPS)          # (C,)
    w_fold = (params["conv_w"] * s1[:, None]).T.astype(f32)              # (K, C)
    b_fold = ((params["conv_b"] - params["bn1_m"]) * s1
              + params["bn1_b"]).astype(f32)                             # (C,)

    # Block-diagonal conv RHS (Lpool copies of w_fold) + bias row (ones-lane trick),
    # zero-padded to NP lanes so the conv output is lane-dense and already flattened.
    wc = jnp.kron(jnp.eye(Lpool, dtype=f32), w_fold)                     # (Lpool*K, F)
    wc = jnp.concatenate([wc, jnp.tile(b_fold, Lpool)[None, :]], axis=0)  # (Lpool*K+1, F)
    wc = jnp.pad(wc, ((0, 0), (0, NP - F)))                              # (Kc1, NP)

    # BN2 fold into h1 + flatten permutation (PyTorch c*Lpool+l -> kernel l*C+c) on the rows.
    s2 = params["bn2_g"] * jax.lax.rsqrt(params["bn2_v"] + EPS)          # (H,)
    w1 = jnp.transpose(params["h1_w"].reshape(H, C, Lpool), (2, 1, 0)).reshape(F, H)
    w1 = jnp.pad((w1 * s2[None, :]).astype(f32), ((0, NP - F), (0, 0)))  # (NP, H)
    b1 = ((params["h1_b"] - params["bn2_m"]) * s2
          + params["bn2_b"]).reshape(1, H).astype(f32)                   # (1, H)
    w2 = params["out_w"].reshape(1, H).astype(f32)                       # (1, H)
    b2 = params["out_b"].reshape(1).astype(f32)                          # (1,)  -> SMEM
    return {"wc": wc, "w1": w1, "b1": b1, "w2": w2, "b2": b2}


# ----------------------------------------------------------------------------
# Forward
# ----------------------------------------------------------------------------
@functools.partial(jax.jit, static_argnames=("K", "stride", "padding", "pool"))
def conv_para_network_forward(x, folded, *, K, stride, padding, pool):
    assert pool == 2, "module uses MaxPool1d(kernel_size=2)"
    B, _, L = x.shape
    f32 = jnp.float32
    Lout = (L - K + 2 * padding) // stride + 1
    Lpool = Lout // pool
    Kcat = Lpool * K
    Bp = _round_up(B, 8)                         # sublane-aligned batch
    Lp = L + 2 * padding

    # Host prep: one zero pad (spatial + batch), one constant-1 pad (bias lane source),
    # and two constant-index gathers building the even/odd im2col LHS rows directly.
    xp = jnp.pad(x[:, 0, :].astype(f32), ((0, Bp - B), (padding, padding)))  # (Bp, Lp)
    src = jnp.pad(xp, ((0, 0), (0, 1)), constant_values=1.0)                 # (Bp, Lp+1)

    l_idx = np.repeat(np.arange(Lpool), K)            # trace-time constants
    k_idx = np.tile(np.arange(K), Lpool)
    cols_e = np.concatenate([(2 * l_idx) * stride + k_idx, [Lp]]).astype(np.int32)
    cols_o = np.concatenate([(2 * l_idx + 1) * stride + k_idx, [Lp]]).astype(np.int32)
    xe = src[:, cols_e]                               # (Bp, Kcat+1)
    xo = src[:, cols_o]                               # (Bp, Kcat+1)

    vmem = pl.BlockSpec(memory_space=pltpu.MemorySpace.VMEM)
    smem = pl.BlockSpec(memory_space=pltpu.MemorySpace.SMEM)

    out = pl.pallas_call(
        fused_kernel,
        out_shape=jax.ShapeDtypeStruct((Bp, 1), f32),
        in_specs=[vmem, vmem, vmem, vmem, vmem, vmem, smem],
        out_specs=vmem,
    )(xe, xo, folded["wc"], folded["w1"], folded["b1"], folded["w2"], folded["b2"])
    return out[:B]


# ----------------------------------------------------------------------------
# Pure-JAX reference (same eval-mode semantics) for the numeric check.
# ----------------------------------------------------------------------------
def im2col_1d(x, K, stride, padding):
    B, _, L = x.shape
    Lout = (L - K + 2 * padding) // stride + 1
    xp = jnp.pad(x[:, 0, :], ((0, 0), (padding, padding)))
    idx = jnp.arange(Lout)[:, None] * stride + jnp.arange(K)[None, :]
    return xp[:, idx], Lout


def reference_forward(x, params, *, K, stride, padding, pool):
    B = x.shape[0]
    patches, Lout = im2col_1d(x, K, stride, padding)
    conv = jnp.einsum("blk,ck->bcl", patches, params["conv_w"]) + params["conv_b"][None, :, None]
    s1 = params["bn1_g"] / jnp.sqrt(params["bn1_v"] + EPS)
    bn1 = (conv - params["bn1_m"][None, :, None]) * s1[None, :, None] + params["bn1_b"][None, :, None]
    Lpool = Lout // pool
    pooled = jnp.max(bn1[:, :, :Lpool * pool].reshape(B, -1, Lpool, pool), axis=-1)
    act = jnp.maximum(pooled, 0.0)
    flat = act.reshape(B, -1)
    h = flat @ params["h1_w"].T + params["h1_b"]
    s2 = params["bn2_g"] / jnp.sqrt(params["bn2_v"] + EPS)
    h = jnp.maximum((h - params["bn2_m"]) * s2 + params["bn2_b"], 0.0)
    return h @ params["out_w"].T + params["out_b"]


if __name__ == "__main__":
    # Small, self-consistent hyper-parameters (module defaults scaled down).
    B = 4
    input_size = 64
    num_channels = 8
    conv_kernel_size = 8
    stride = 2
    padding = 1
    pool_kernel_size = 2
    h1_size = 32

    conv1_size = (input_size - conv_kernel_size + 2 * padding) // stride + 1    # 30
    h1_in = conv1_size // pool_kernel_size * num_channels                        # 120

    key = jax.random.PRNGKey(0)
    ks = jax.random.split(key, 15)
    f32 = jnp.float32
    params = {
        "conv_w": 0.1 * jax.random.normal(ks[0], (num_channels, conv_kernel_size), f32),
        "conv_b": 0.1 * jax.random.normal(ks[1], (num_channels,), f32),
        "bn1_g": 1.0 + 0.1 * jax.random.normal(ks[2], (num_channels,), f32),
        "bn1_b": 0.1 * jax.random.normal(ks[3], (num_channels,), f32),
        "bn1_m": 0.1 * jax.random.normal(ks[4], (num_channels,), f32),
        "bn1_v": 1.0 + 0.1 * jnp.abs(jax.random.normal(ks[5], (num_channels,), f32)),
        "h1_w": 0.1 * jax.random.normal(ks[6], (h1_size, h1_in), f32),
        "h1_b": 0.1 * jax.random.normal(ks[7], (h1_size,), f32),
        "bn2_g": 1.0 + 0.1 * jax.random.normal(ks[8], (h1_size,), f32),
        "bn2_b": 0.1 * jax.random.normal(ks[9], (h1_size,), f32),
        "bn2_m": 0.1 * jax.random.normal(ks[10], (h1_size,), f32),
        "bn2_v": 1.0 + 0.1 * jnp.abs(jax.random.normal(ks[11], (h1_size,), f32)),
        "out_w": 0.1 * jax.random.normal(ks[12], (1, h1_size), f32),
        "out_b": 0.1 * jax.random.normal(ks[13], (1,), f32),
    }

    x = jax.random.normal(ks[14], (B, 1, input_size), f32)

    folded = fold_params(params, input_size=input_size, K=conv_kernel_size,
                         stride=stride, padding=padding, pool=pool_kernel_size)

    y = conv_para_network_forward(x, folded, K=conv_kernel_size, stride=stride,
                                  padding=padding, pool=pool_kernel_size)
    y = jax.block_until_ready(y)

    y_ref = reference_forward(x, params, K=conv_kernel_size, stride=stride,
                              padding=padding, pool=pool_kernel_size)
    assert y.shape == (B, 1)
    assert jnp.allclose(y, y_ref, rtol=1e-3, atol=1e-3), (y, y_ref)

    print("KERNEL_OK")
</pallas_src>

<mosaic_0001>
module attributes {stable_mosaic.version = 11 : i64} {
  func.func @fused_kernel(%arg0: memref<8x121xf32, #tpu.memory_space<vmem>>, %arg1: memref<8x121xf32, #tpu.memory_space<vmem>>, %arg2: memref<121x128xf32, #tpu.memory_space<vmem>>, %arg3: memref<128x32xf32, #tpu.memory_space<vmem>>, %arg4: memref<1x32xf32, #tpu.memory_space<vmem>>, %arg5: memref<1x32xf32, #tpu.memory_space<vmem>>, %arg6: memref<1xf32, #tpu.memory_space<smem>>, %arg7: memref<8x1xf32, #tpu.memory_space<vmem>>) attributes {dimension_semantics = [], scalar_prefetch = 0 : i64, scratch_operands = 0 : i64, tpu.core_type = #tpu.core_type<tc>} {
    %c0 = arith.constant 0 : index
    %c0_0 = arith.constant 0 : index
    %0 = vector.load %arg0[%c0, %c0_0] : memref<8x121xf32, #tpu.memory_space<vmem>>, vector<8x121xf32>
    %c0_1 = arith.constant 0 : index
    %c0_2 = arith.constant 0 : index
    %1 = vector.load %arg2[%c0_1, %c0_2] : memref<121x128xf32, #tpu.memory_space<vmem>>, vector<121x128xf32>
    %cst = arith.constant dense<0.000000e+00> : vector<8x128xf32>
    %2 = tpu.matmul %0, %1, %cst {dimension_numbers = #tpu.dot_dimension_numbers<[1], [0], [0], [1], [0, 0, 1, 1], [], []>} : vector<8x121xf32>, vector<121x128xf32>, vector<8x128xf32> -> vector<8x128xf32>
    %c0_3 = arith.constant 0 : index
    %c0_4 = arith.constant 0 : index
    %3 = vector.load %arg1[%c0_3, %c0_4] : memref<8x121xf32, #tpu.memory_space<vmem>>, vector<8x121xf32>
    %c0_5 = arith.constant 0 : index
    %c0_6 = arith.constant 0 : index
    %4 = vector.load %arg2[%c0_5, %c0_6] : memref<121x128xf32, #tpu.memory_space<vmem>>, vector<121x128xf32>
    %cst_7 = arith.constant dense<0.000000e+00> : vector<8x128xf32>
    %5 = tpu.matmul %3, %4, %cst_7 {dimension_numbers = #tpu.dot_dimension_numbers<[1], [0], [0], [1], [0, 0, 1, 1], [], []>} : vector<8x121xf32>, vector<121x128xf32>, vector<8x128xf32> -> vector<8x128xf32>
    %6 = arith.maximumf %2, %5 : vector<8x128xf32>
    %cst_8 = arith.constant 0.000000e+00 : f32
    %7 = vector.broadcast %cst_8 : f32 to vector<8x128xf32>
    %8 = arith.maximumf %6, %7 : vector<8x128xf32>
    %c0_9 = arith.constant 0 : index
    %c0_10 = arith.constant 0 : index
    %9 = vector.load %arg3[%c0_9, %c0_10] : memref<128x32xf32, #tpu.memory_space<vmem>>, vector<128x32xf32>
    %cst_11 = arith.constant dense<0.000000e+00> : vector<8x32xf32>
    %10 = tpu.matmul %8, %9, %cst_11 {dimension_numbers = #tpu.dot_dimension_numbers<[1], [0], [0], [1], [0, 0, 1, 1], [], []>} : vector<8x128xf32>, vector<128x32xf32>, vector<8x32xf32> -> vector<8x32xf32>
    %c0_12 = arith.constant 0 : index
    %c0_13 = arith.constant 0 : index
    %11 = vector.load %arg4[%c0_12, %c0_13] : memref<1x32xf32, #tpu.memory_space<vmem>>, vector<1x32xf32>
    %12 = vector.broadcast %11 : vector<1x32xf32> to vector<8x32xf32>
    %13 = arith.addf %10, %12 : vector<8x32xf32>
    %cst_14 = arith.constant 0.000000e+00 : f32
    %14 = vector.broadcast %cst_14 : f32 to vector<8x32xf32>
    %15 = arith.maximumf %13, %14 : vector<8x32xf32>
    %c0_15 = arith.constant 0 : index
    %c0_16 = arith.constant 0 : index
    %16 = vector.load %arg5[%c0_15, %c0_16] : memref<1x32xf32, #tpu.memory_space<vmem>>, vector<1x32xf32>
    %17 = vector.broadcast %16 : vector<1x32xf32> to vector<8x32xf32>
    %18 = arith.mulf %15, %17 : vector<8x32xf32>
    %cst_17 = arith.constant dense<0.000000e+00> : vector<8xf32>
    %19 = vector.multi_reduction <add>, %18, %cst_17 [1] : vector<8x32xf32> to vector<8xf32>
    %20 = vector.shape_cast %19 : vector<8xf32> to vector<8x1xf32>
    %c0_18 = arith.constant 0 : index
    %21 = memref.load %arg6[%c0_18] : memref<1xf32, #tpu.memory_space<smem>>
    %22 = vector.broadcast %21 : f32 to vector<8x1xf32>
    %23 = arith.addf %20, %22 : vector<8x1xf32>
    %c0_19 = arith.constant 0 : index
    %c0_20 = arith.constant 0 : index
    %24 = vector.load %arg7[%c0_19, %c0_20] : memref<8x1xf32, #tpu.memory_space<vmem>>, vector<8x1xf32>
    tpu.vector_store %arg7[%c0_19, %c0_20], %23 {strides = array<i32>} : memref<8x1xf32, #tpu.memory_space<vmem>>, vector<8x1xf32>,
    return
  }
}

</mosaic_0001>

<llo_original>
// kernel: conv_para_network_forward.1
$region0: #{conv_para_network_forward.1}
  #allocation0 [shape = 'u32[]', space=smem, size = 0x4, offset = 0x4, fixed_abs, tag = 'smem constant byte address 0x4 - core index']
  #allocation1 [shape = 'u32[144,128]{1,0:T(1,128)}', space=vmem, size = 0x12000, scoped, tag = 'internal scratch']
  #allocation2 [shape = 'f32[1]{0:T(128)S(6)}', space=smem, size = 0x200, scoped, tag = 'scoped memory for conv_para_network_forward.1']
  %s0 = inlined_call_operand.vmem [shape: f32[8,121], index: 0, kind: input, shape index: {}]
  %s1 = inlined_call_operand.vmem [shape: f32[8,121], index: 1, kind: input, shape index: {}]
  %s2 = inlined_call_operand.vmem [shape: f32[121,128], index: 2, kind: input, shape index: {}]
  %s3 = inlined_call_operand.vmem [shape: f32[128,32], index: 3, kind: input, shape index: {}]
  %s4 = inlined_call_operand.vmem [shape: f32[1,32], index: 4, kind: input, shape index: {}]
  %s5 = inlined_call_operand.vmem [shape: f32[1,32], index: 5, kind: input, shape index: {}]
  %s6 = inlined_call_operand.<no memory space> [shape: f32[1], index: 6, kind: input, shape index: {}]
  %s7 = inlined_call_operand.vmem [shape: f32[8,1], index: 7, kind: output, shape index: {}]
  %s8 = sld [smem:[#allocation0]]
  $region38: #{conv_para_network_forward.1} parent=0
    _
  %s10 = ssub.s32 1, %s8
  %s11 = scalar_select 0, %s10, %s8
  %12 = sst [smem:[#allocation2]] %s6
  // Predicated region
  $region2: #{conv_para_network_forward.1} parent=0 // pred_check
    _
  $region3: #{conv_para_network_forward.1} parent=0 // pred_check_branch
    %14 = sbr.rel (0) target = $region5
  $region4: #{conv_para_network_forward.1} parent=0 // pred_region
    _
  $region5: #{conv_para_network_forward.1} parent=0 // pred_fallthru
    _
  // Predicated region
  $region6: #{conv_para_network_forward.1} parent=0 // pred_check
    _
  $region7: #{conv_para_network_forward.1} parent=0 // pred_check_branch
    %16 = sbr.rel (0) target = $region9
  $region8: #{conv_para_network_forward.1} parent=0 // pred_region
    _
  $region9: #{conv_para_network_forward.1} parent=0 // pred_fallthru
    _
  // Predicated region
  $region10: #{conv_para_network_forward.1} parent=0 // pred_check
    _
  $region11: #{conv_para_network_forward.1} parent=0 // pred_check_branch
    %18 = sbr.rel (0) target = $region13
  $region12: #{conv_para_network_forward.1} parent=0 // pred_region
    _
  $region13: #{conv_para_network_forward.1} parent=0 // pred_fallthru
    _
  // Predicated region
  $region14: #{conv_para_network_forward.1} parent=0 // pred_check
    _
  $region15: #{conv_para_network_forward.1} parent=0 // pred_check_branch
    %20 = sbr.rel (0) target = $region17
  $region16: #{conv_para_network_forward.1} parent=0 // pred_region
    _
  $region17: #{conv_para_network_forward.1} parent=0 // pred_fallthru
    _
  // Predicated region
  $region18: #{conv_para_network_forward.1} parent=0 // pred_check
    _
  $region19: #{conv_para_network_forward.1} parent=0 // pred_check_branch
    %22 = sbr.rel (0) target = $region21
  $region20: #{conv_para_network_forward.1} parent=0 // pred_region
    _
  $region21: #{conv_para_network_forward.1} parent=0 // pred_fallthru
    _
  // Predicated region
  $region22: #{conv_para_network_forward.1} parent=0 // pred_check
    _
  $region23: #{conv_para_network_forward.1} parent=0 // pred_check_branch
    %24 = sbr.rel (0) target = $region25
  $region24: #{conv_para_network_forward.1} parent=0 // pred_region
    _
  $region25: #{conv_para_network_forward.1} parent=0 // pred_fallthru
    _
  // Predicated region
  $region26: #{conv_para_network_forward.1} parent=0 // pred_check
    _
  $region27: #{conv_para_network_forward.1} parent=0 // pred_check_branch
    %26 = sbr.rel (0) target = $region29
  $region28: #{conv_para_network_forward.1} parent=0 // pred_region
    _
  $region29: #{conv_para_network_forward.1} parent=0 // pred_fallthru
    _
  %v27 = vld [vmem:[%s0] sm:$0xff]
  %v28 = vld [vmem:[%s2] sm:$0xff]
  %v29 = vld [vmem:[%s2 + $0x8] sm:$0xff]
  %v30 = vld [vmem:[%s2 + $0x10] sm:$0xff]
  %v31 = vld [vmem:[%s2 + $0x18] sm:$0xff]
  %v32 = vld [vmem:[%s2 + $0x20] sm:$0xff]
  %v33 = vld [vmem:[%s2 + $0x28] sm:$0xff]
  %v34 = vld [vmem:[%s2 + $0x30] sm:$0xff]
  %v35 = vld [vmem:[%s2 + $0x38] sm:$0xff]
  %v36 = vld [vmem:[%s2 + $0x40] sm:$0xff]
  %v37 = vld [vmem:[%s2 + $0x48] sm:$0xff]
  %v38 = vld [vmem:[%s2 + $0x50] sm:$0xff]
  %v39 = vld [vmem:[%s2 + $0x58] sm:$0xff]
  %v40 = vld [vmem:[%s2 + $0x60] sm:$0xff]
  %v41 = vld [vmem:[%s2 + $0x68] sm:$0xff]
  %v42 = vld [vmem:[%s2 + $0x70] sm:$0xff]
  %v43 = vld [vmem:[%s2 + $0x78] sm:$0x1]
  %vm44 = vcmask 990208
  %v46 = vsel %vm44, %v27, 0
  %vm48 = vcmask 1040384
  %v50 = vsel %vm48, %v43, 0
  %52 = vmatprep.subr.mxu0 0.0
  %53 = vmatpush1.msra.mxu0 %v50
  %54 = vmatprep.subr.mxu0 0.0
  %55 = vmatpush1.msra.mxu0 %v42
  %56 = vmatprep.subr.mxu0 0.0
  %57 = vmatpush1.msra.mxu0 %v41
  %58 = vmatprep.subr.mxu0 0.0
  %59 = vmatpush1.msra.mxu0 %v40
  %60 = vmatprep.subr.mxu0 0.0
  %61 = vmatpush1.msra.mxu0 %v39
  %62 = vmatprep.subr.mxu0 0.0
  %63 = vmatpush1.msra.mxu0 %v38
  %64 = vmatprep.subr.mxu0 0.0
  %65 = vmatpush1.msra.mxu0 %v37
  %66 = vmatprep.subr.mxu0 0.0
  %67 = vmatpush1.msra.mxu0 %v36
  %68 = vmatprep.subr.mxu0 0.0
  %69 = vmatpush1.msra.mxu0 %v35
  %70 = vmatprep.subr.mxu0 0.0
  %71 = vmatpush1.msra.mxu0 %v34
  %72 = vmatprep.subr.mxu0 0.0
  %73 = vmatpush1.msra.mxu0 %v33
  %74 = vmatprep.subr.mxu0 0.0
  %75 = vmatpush1.msra.mxu0 %v32
  %76 = vmatprep.subr.mxu0 0.0
  %77 = vmatpush1.msra.mxu0 %v31
  %78 = vmatprep.subr.mxu0 0.0
  %79 = vmatpush1.msra.mxu0 %v30
  %80 = vmatprep.subr.mxu0 0.0
  %81 = vmatpush1.msra.mxu0 %v29
  %82 = vmatprep.subr.mxu0 0.0
  %83 = vmatpush1.msra.mxu0 %v28
  %84 = vmatprep.subr.mxu0 0.0
  %85 = vmatpush2.msra.mxu0 0.0
  %86 = vmatprep.subr.mxu0 0.0
  %87 = vmatpush2.msra.mxu0 0.0
  %88 = vmatprep.subr.mxu0 0.0
  %89 = vmatpush2.msra.mxu0 0.0
  %90 = vmatprep.subr.mxu0 0.0
  %91 = vmatpush2.msra.mxu0 0.0
  %92 = vmatprep.subr.mxu0 0.0
  %93 = vmatpush2.msra.mxu0 0.0
  %94 = vmatprep.subr.mxu0 0.0
  %95 = vmatpush2.msra.mxu0 0.0
  %96 = vmatprep.subr.mxu0 0.0
  %97 = vmatpush2.msra.mxu0 0.0
  %98 = vmatprep.subr.mxu0 0.0
  %99 = vmatpush2.msra.mxu0 0.0
  %100 = vmatprep.subr.mxu0 0.0
  %101 = vmatpush2.msra.mxu0 0.0
  %102 = vmatprep.subr.mxu0 0.0
  %103 = vmatpush2.msra.mxu0 0.0
  %104 = vmatprep.subr.mxu0 0.0
  %105 = vmatpush2.msra.mxu0 0.0
  %106 = vmatprep.subr.mxu0 0.0
  %107 = vmatpush2.msra.mxu0 0.0
  %108 = vmatprep.subr.mxu0 0.0
  %109 = vmatpush2.msra.mxu0 0.0
  %110 = vmatprep.subr.mxu0 0.0
  %111 = vmatpush2.msra.mxu0 0.0
  %112 = vmatprep.subr.mxu0 0.0
  %113 = vmatpush2.msra.mxu0 0.0
  %114 = vmatprep.subr.mxu0 0.0
  %115 = vmatpush2.msra.mxu0 0.0
  %116 = vmatprep.mubr.f32.mxu0 0.0
  %117 = vmatmul.mubr.f32.gmra.mxu0 %v46
  %v118 = vpop.f32.mrf.mxu0
  %v119 = vadd.f32 0.0, %v118
  %v120 = vpop.f32.mrf.mxu0
  %121 = vdwg.mxu0
  %v122 = vld [vmem:[%s1] sm:$0xff]
  %v124 = vsel %vm44, %v122, 0
  %126 = vmatprep.subr.mxu0 0.0
  %127 = vmatpush1.msra.mxu0 %v50
  %128 = vmatprep.subr.mxu0 0.0
  %129 = vmatpush1.msra.mxu0 %v42
  %130 = vmatprep.subr.mxu0 0.0
  %131 = vmatpush1.msra.mxu0 %v41
  %132 = vmatprep.subr.mxu0 0.0
  %133 = vmatpush1.msra.mxu0 %v40
  %134 = vmatprep.subr.mxu0 0.0
  %135 = vmatpush1.msra.mxu0 %v39
  %136 = vmatprep.subr.mxu0 0.0
  %137 = vmatpush1.msra.mxu0 %v38
  %138 = vmatprep.subr.mxu0 0.0
  %139 = vmatpush1.msra.mxu0 %v37
  %140 = vmatprep.subr.mxu0 0.0
  %141 = vmatpush1.msra.mxu0 %v36
  %142 = vmatprep.subr.mxu0 0.0
  %143 = vmatpush1.msra.mxu0 %v35
  %144 = vmatprep.subr.mxu0 0.0
  %145 = vmatpush1.msra.mxu0 %v34
  %146 = vmatprep.subr.mxu0 0.0
  %147 = vmatpush1.msra.mxu0 %v33
  %148 = vmatprep.subr.mxu0 0.0
  %149 = vmatpush1.msra.mxu0 %v32
  %150 = vmatprep.subr.mxu0 0.0
  %151 = vmatpush1.msra.mxu0 %v31
  %152 = vmatprep.subr.mxu0 0.0
  %153 = vmatpush1.msra.mxu0 %v30
  %154 = vmatprep.subr.mxu0 0.0
  %155 = vmatpush1.msra.mxu0 %v29
  %156 = vmatprep.subr.mxu0 0.0
  %157 = vmatpush1.msra.mxu0 %v28
  %158 = vmatprep.subr.mxu0 0.0
  %159 = vmatpush2.msra.mxu0 0.0
  %160 = vmatprep.subr.mxu0 0.0
  %161 = vmatpush2.msra.mxu0 0.0
  %162 = vmatprep.subr.mxu0 0.0
  %163 = vmatpush2.msra.mxu0 0.0
  %164 = vmatprep.subr.mxu0 0.0
  %165 = vmatpush2.msra.mxu0 0.0
  %166 = vmatprep.subr.mxu0 0.0
  %167 = vmatpush2.msra.mxu0 0.0
  %168 = vmatprep.subr.mxu0 0.0
  %169 = vmatpush2.msra.mxu0 0.0
  %170 = vmatprep.subr.mxu0 0.0
  %171 = vmatpush2.msra.mxu0 0.0
  %172 = vmatprep.subr.mxu0 0.0
  %173 = vmatpush2.msra.mxu0 0.0
  %174 = vmatprep.subr.mxu0 0.0
  %175 = vmatpush2.msra.mxu0 0.0
  %176 = vmatprep.subr.mxu0 0.0
  %177 = vmatpush2.msra.mxu0 0.0
  %178 = vmatprep.subr.mxu0 0.0
  %179 = vmatpush2.msra.mxu0 0.0
  %180 = vmatprep.subr.mxu0 0.0
  %181 = vmatpush2.msra.mxu0 0.0
  %182 = vmatprep.subr.mxu0 0.0
  %183 = vmatpush2.msra.mxu0 0.0
  %184 = vmatprep.subr.mxu0 0.0
  %185 = vmatpush2.msra.mxu0 0.0
  %186 = vmatprep.subr.mxu0 0.0
  %187 = vmatpush2.msra.mxu0 0.0
  %188 = vmatprep.subr.mxu0 0.0
  %189 = vmatpush2.msra.mxu0 0.0
  %190 = vmatprep.mubr.f32.mxu0 0.0
  %191 = vmatmul.mubr.f32.gmra.mxu0 %v124
  %v192 = vpop.f32.mrf.mxu0
  %v193 = vadd.f32 0.0, %v192
  %v194 = vpop.f32.mrf.mxu0
  %195 = vdwg.mxu0
  %v196 = vmax.f32 %v119, %v193
  %v197 = vmax.f32 %v196, 0.0
  %v198 = vld [vmem:[%s3] sm:$0xff]
  %v199 = vld [vmem:[%s3 + $0x8] sm:$0xff]
  %v200 = vld [vmem:[%s3 + $0x10] sm:$0xff]
  %v201 = vld [vmem:[%s3 + $0x18] sm:$0xff]
  %v202 = vld [vmem:[%s3 + $0x20] sm:$0xff]
  %v203 = vld [vmem:[%s3 + $0x28] sm:$0xff]
  %v204 = vld [vmem:[%s3 + $0x30] sm:$0xff]
  %v205 = vld [vmem:[%s3 + $0x38] sm:$0xff]
  %v206 = vld [vmem:[%s3 + $0x40] sm:$0xff]
  %v207 = vld [vmem:[%s3 + $0x48] sm:$0xff]
  %v208 = vld [vmem:[%s3 + $0x50] sm:$0xff]
  %v209 = vld [vmem:[%s3 + $0x58] sm:$0xff]
  %v210 = vld [vmem:[%s3 + $0x60] sm:$0xff]
  %v211 = vld [vmem:[%s3 + $0x68] sm:$0xff]
  %v212 = vld [vmem:[%s3 + $0x70] sm:$0xff]
  %v213 = vld [vmem:[%s3 + $0x78] sm:$0xff]
  %v214 = vld [vmem:[%s4] sm:$0x1]
  %v216 = vlaneseq
  %v217 = vshrl.u32 %v216, 7
  %v218 = vsub.s32 0, %v217
  %v219 = vrot.slane %v214, %v218
  %221 = vmatprep.subr.mxu0 0.0
  %222 = vmatpush1.msra.mxu0 %v213
  %223 = vmatprep.subr.mxu0 0.0
  %224 = vmatpush1.msra.mxu0 %v212
  %225 = vmatprep.subr.mxu0 0.0
  %226 = vmatpush1.msra.mxu0 %v211
  %227 = vmatprep.subr.mxu0 0.0
  %228 = vmatpush1.msra.mxu0 %v210
  %229 = vmatprep.subr.mxu0 0.0
  %230 = vmatpush1.msra.mxu0 %v209
  %231 = vmatprep.subr.mxu0 0.0
  %232 = vmatpush1.msra.mxu0 %v208
  %233 = vmatprep.subr.mxu0 0.0
  %234 = vmatpush1.msra.mxu0 %v207
  %235 = vmatprep.subr.mxu0 0.0
  %236 = vmatpush1.msra.mxu0 %v206
  %237 = vmatprep.subr.mxu0 0.0
  %238 = vmatpush1.msra.mxu0 %v205
  %239 = vmatprep.subr.mxu0 0.0
  %240 = vmatpush1.msra.mxu0 %v204
  %241 = vmatprep.subr.mxu0 0.0
  %242 = vmatpush1.msra.mxu0 %v203
  %243 = vmatprep.subr.mxu0 0.0
  %244 = vmatpush1.msra.mxu0 %v202
  %245 = vmatprep.subr.mxu0 0.0
  %246 = vmatpush1.msra.mxu0 %v201
  %247 = vmatprep.subr.mxu0 0.0
  %248 = vmatpush1.msra.mxu0 %v200
  %249 = vmatprep.subr.mxu0 0.0
  %250 = vmatpush1.msra.mxu0 %v199
  %251 = vmatprep.subr.mxu0 0.0
  %252 = vmatpush1.msra.mxu0 %v198
  %253 = vmatprep.subr.mxu0 0.0
  %254 = vmatpush2.msra.mxu0 0.0
  %255 = vmatprep.subr.mxu0 0.0
  %256 = vmatpush2.msra.mxu0 0.0
  %257 = vmatprep.subr.mxu0 0.0
  %258 = vmatpush2.msra.mxu0 0.0
  %259 = vmatprep.subr.mxu0 0.0
  %260 = vmatpush2.msra.mxu0 0.0
  %261 = vmatprep.subr.mxu0 0.0
  %262 = vmatpush2.msra.mxu0 0.0
  %263 = vmatprep.subr.mxu0 0.0
  %264 = vmatpush2.msra.mxu0 0.0
  %265 = vmatprep.subr.mxu0 0.0
  %266 = vmatpush2.msra.mxu0 0.0
  %267 = vmatprep.subr.mxu0 0.0
  %268 = vmatpush2.msra.mxu0 0.0
  %269 = vmatprep.subr.mxu0 0.0
  %270 = vmatpush2.msra.mxu0 0.0
  %271 = vmatprep.subr.mxu0 0.0
  %272 = vmatpush2.msra.mxu0 0.0
  %273 = vmatprep.subr.mxu0 0.0
  %274 = vmatpush2.msra.mxu0 0.0
  %275 = vmatprep.subr.mxu0 0.0
  %276 = vmatpush2.msra.mxu0 0.0
  %277 = vmatprep.subr.mxu0 0.0
  %278 = vmatpush2.msra.mxu0 0.0
  %279 = vmatprep.subr.mxu0 0.0
  %280 = vmatpush2.msra.mxu0 0.0
  %281 = vmatprep.subr.mxu0 0.0
  %282 = vmatpush2.msra.mxu0 0.0
  %283 = vmatprep.subr.mxu0 0.0
  %284 = vmatpush2.msra.mxu0 0.0
  %285 = vmatprep.mubr.f32.mxu0 0.0
  %286 = vmatmul.mubr.f32.gmra.mxu0 %v197
  %v287 = vpop.f32.mrf.mxu0
  %v288 = vadd.f32 %v219, %v287
  %v289 = vpop.f32.mrf.mxu0
  %290 = vdwg.mxu0
  %v291 = vmax.f32 %v288, 0.0
  %v292 = vld [vmem:[%s5] sm:$0x1]
  %v294 = vlaneseq
  %v295 = vshrl.u32 %v294, 7
  %v296 = vsub.s32 0, %v295
  %v297 = vrot.slane %v292, %v296
  %v299 = vmul.f32 %v291, %v297
  %vm300 = vcmask 261120
  %v301 = vsel %vm300, %v299, 0.0
  %302 = vadd.xlane.f32.xlu0 %v301
  %v303 = vpop.xlane.xlu0 %302
  %s304 = sld [smem:[#allocation2]]
  %v305 = vstv %s304
  %v306 = vadd.f32 %v303, %v305
  %vm307 = vcmask 7168
  %308 = vst.msk [vmem:[%s7] sm:$0xff] %vm307, %v306
  // Predicated region
  $region30: #{conv_para_network_forward.1} parent=0 // pred_check
    _
  $region31: #{conv_para_network_forward.1} parent=0 // pred_check_branch
    %310 = sbr.rel (0) target = $region33
  $region32: #{conv_para_network_forward.1} parent=0 // pred_region
    _
  $region33: #{conv_para_network_forward.1} parent=0 // pred_fallthru
    _
  // Predicated region
  $region34: #{conv_para_network_forward.1} parent=0 // pred_check
    _
  $region35: #{conv_para_network_forward.1} parent=0 // pred_check_branch
    %312 = sbr.rel (0) target = $region37
  $region36: #{conv_para_network_forward.1} parent=0 // pred_region
    _
  $region37: #{conv_para_network_forward.1} parent=0 // pred_fallthru
    _

</llo_original>
